<compile_context>
chip_gen: v5e
topology: v5e:2x2
jax: 0.10.0
libtpu: 0.0.40
codegen_flags: <defaults>
</compile_context>

<pallas_src>
import functools

import jax
import jax.numpy as jnp
from jax.experimental import pallas as pl
from jax.experimental.pallas import tpu as pltpu

KH = KW = 3
PAD = 1
NTAPS = KH * KW


def _round_up(x, m):
    return (x + m - 1) // m * m


# ---------------------------------------------------------------------------
# pltpu.roll direction probe (one tiny kernel, cached)
# ---------------------------------------------------------------------------
_ROLL_SIGN = None


def _roll_sign():
    """Return s such that pltpu.roll(x, s*k, axis=-1) maps element q -> q+k."""
    global _ROLL_SIGN
    if _ROLL_SIGN is None:
        def _probe(x_ref, o_ref):
            o_ref[...] = pltpu.roll(x_ref[...], 1, 1)

        with jax.ensure_compile_time_eval():
            x = jnp.broadcast_to(jnp.arange(128, dtype=jnp.float32)[None, :],
                                 (8, 128))
            y = pl.pallas_call(
                _probe,
                out_shape=jax.ShapeDtypeStruct((8, 128), jnp.float32))(x)
            # jnp.roll semantics would give y[0, 1] == x[0, 0] == 0.0
            _ROLL_SIGN = 1 if abs(float(y[0, 1])) < 0.5 else -1
    return _ROLL_SIGN


# ---------------------------------------------------------------------------
# Fused kernel
# ---------------------------------------------------------------------------
def _deform_kernel(xq_ref, w_off_ref, b_off_ref, w_def_ref, out_ref, xw_ref, *,
                   H, W, C, TH, Wp, Qp_pad, roll_sign, mxu_dtype, select_dtype):
    TP = TH * W
    t = pl.program_id(1)

    # ---- per-batch init: fold the grouped deform-conv weight into the flat
    #      padded image once; every row tile of this batch reuses the scratch.
    @pl.when(t == 0)
    def _():
        xq_full = xq_ref[0]                                      # [Qp_pad, C]
        for k in range(NTAPS):
            xw_ref[k] = jnp.dot(
                xq_full, w_def_ref[k],
                preferred_element_type=jnp.float32).astype(mxu_dtype)

    # ---- offset-generating 3x3 conv (padding=1, stride=1, bias=True) -------
    # Bands are derived from the single flat input; Wp % 8 == 0 by
    # construction so the split reshape below is sublane aligned.
    base = pl.multiple_of(t * (TH * Wp), TH * Wp)
    frame = xq_ref[0, pl.ds(base, (TH + 2) * Wp), :].reshape(TH + 2, Wp, C)
    off = jnp.zeros((TP, 2 * NTAPS), jnp.float32)
    for di in range(KH):
        for dj in range(KW):
            # NOTE: the (TH, W, C) -> (TP, C) merge is cheap when W % 8 == 0.
            win = frame[di:di + TH, dj:dj + W, :].reshape(TP, C)
            off = off + jnp.dot(win, w_off_ref[di * KW + dj],
                                preferred_element_type=jnp.float32)
    off = off + b_off_ref[...]                                   # [TP, 18]
    off_y = off[:, :NTAPS]                                       # [TP, 9]
    off_x = off[:, NTAPS:]                                       # [TP, 9]

    # ---- sampling coordinates / bilinear weights (f32, all 9 taps at once) -
    row0 = t * TH
    p_iota = jax.lax.broadcasted_iota(jnp.int32, (TP, 1), 0)
    h_idx = (p_iota // W + row0).astype(jnp.float32)              # [TP, 1]
    w_idx = (p_iota % W).astype(jnp.float32)                      # [TP, 1]
    k_iota = jax.lax.broadcasted_iota(jnp.int32, (1, NTAPS), 1)
    base_y = (k_iota // KW - PAD).astype(jnp.float32)             # [1, 9]
    base_x = (k_iota % KW - PAD).astype(jnp.float32)              # [1, 9]

    y = h_idx + base_y + off_y                                    # [TP, 9]
    x = w_idx + base_x + off_x                                    # [TP, 9]
    valid = ((y > -1.0) & (y < float(H)) &
             (x > -1.0) & (x < float(W))).astype(jnp.float32)
    y0 = jnp.floor(y)
    x0 = jnp.floor(x)
    ly = y - y0
    lx = x - x0
    # Bilinear corner weights; only these (not the coordinates) drop to the
    # low-precision select dtype, so no corner flips can occur.
    w00 = ((1.0 - ly) * (1.0 - lx) * valid).astype(select_dtype)
    w01 = ((1.0 - ly) * lx * valid).astype(select_dtype)
    w10 = (ly * (1.0 - lx) * valid).astype(select_dtype)
    w11 = (ly * lx * valid).astype(select_dtype)
    # flat index of the top-left corner in the padded [Hp, Wp] frame
    f00 = (y0.astype(jnp.int32) + PAD) * Wp + (x0.astype(jnp.int32) + PAD)

    # ---- per-tap one-hot bilinear gather as MXU matmuls ---------------------
    # One integer compare per tap; weights folded into the selects; the other
    # bilinear corners via XLU lane rolls (never wrap into live columns
    # because max weighted index + Wp + 1 < Qp_pad -- asserted in the wrapper).
    q_iota = jax.lax.broadcasted_iota(jnp.int32, (1, Qp_pad), 1)
    zero = jnp.zeros((), select_dtype)
    out = jnp.zeros((TP, C), jnp.float32)
    for k in range(NTAPS):
        eq = f00[:, k:k + 1] == q_iota                            # [TP, Qp_pad]
        tl = jnp.where(eq, w00[:, k:k + 1], zero)
        tr = jnp.where(eq, w01[:, k:k + 1], zero)
        bl = jnp.where(eq, w10[:, k:k + 1], zero)
        br = jnp.where(eq, w11[:, k:k + 1], zero)
        top = tl + pltpu.roll(tr, roll_sign * 1, 1)               # (y0, x0+1)
        bot = bl + pltpu.roll(br, roll_sign * 1, 1)
        s = top + pltpu.roll(bot, roll_sign * Wp, 1)              # (+1 row)
        if s.dtype != jnp.dtype(mxu_dtype):
            s = s.astype(mxu_dtype)
        out = out + jnp.dot(s, xw_ref[k],
                            preferred_element_type=jnp.float32)

    # TODO(synk): a lane-dense (TH, W*C) output slab would avoid C-wide masked
    # stores, but needs a sublane->lane repack; store volume here is only
    # ~C/Qp_pad of the hot-path traffic, so the flat (TP, C) block is kept.
    out_ref[...] = out.reshape(1, TP, C).astype(out_ref.dtype)


# ---------------------------------------------------------------------------
# Weight preparation
# ---------------------------------------------------------------------------
def _dense_group_weight(w_def, C, groups):
    """Grouped weight [C_out, C//g, 3, 3] -> per-tap dense [9, C_in, C_out]."""
    cpg = C // groups
    w_t = jnp.transpose(w_def.reshape(C, cpg, NTAPS), (2, 1, 0))   # [9, cpg, Co]
    ci = jnp.arange(C)
    co = jnp.arange(C)
    mask = (ci[:, None] // cpg == co[None, :] // cpg)              # block diag
    return w_t[:, ci % cpg, :] * mask[None, :, :].astype(w_def.dtype)


def _dense_group_weight_loop(w_def, C, groups):
    """Reference-only loop builder, independent of the vectorized one."""
    cpg = C // groups
    w_dense = jnp.zeros((NTAPS, C, C), jnp.float32)
    for co in range(C):
        g = co // cpg
        for cil in range(cpg):
            ci = g * cpg + cil
            w_dense = w_dense.at[:, ci, co].set(w_def[co, cil].reshape(NTAPS))
    return w_dense


# ---------------------------------------------------------------------------
# Tiling / VMEM heuristics
# ---------------------------------------------------------------------------
def _vmem_caps():
    cap = None
    try:
        info = pltpu.get_tpu_info()
        cap = getattr(info, "vmem_capacity_bytes", None)
    except Exception:
        cap = None
    if not cap:
        cap = 64 * 1024 * 1024            # conservative: v7x per-core VMEM
    budget = int(0.40 * cap)              # per-step footprint target
    hard_cap = int(0.75 * cap)            # never request more than this
    return budget, hard_cap


def _choose_row_tile(H, W, C, Wp, Qp_pad, budget_bytes, sel_bytes, mxu_bytes):
    """Largest divisor-of-H row tile whose per-step VMEM footprint fits."""
    def est(th):
        tp = th * W
        io = 2 * 4 * (Qp_pad * C + NTAPS * C * 2 * NTAPS + 2 * NTAPS
                      + NTAPS * C * C + tp * C)                    # dbl-buffered
        scratch = NTAPS * Qp_pad * C * mxu_bytes                   # xw (single)
        temps = (tp * Qp_pad * (4 + 3 * sel_bytes + mxu_bytes)     # eq/corners/s
                 + 2 * (th + 2) * Wp * C * 4                       # frame band
                 + 4 * tp * 2 * NTAPS * 4                          # offset conv
                 + 14 * tp * NTAPS * 4                             # coord math
                 + 2 * tp * C * 4)                                 # accumulator
        return io + scratch + temps

    best = None
    for th in range(1, H + 1):
        if H % th:
            continue
        if th != H and (th * W) % 8:      # out block (1, th*W, C) alignment
            continue
        if est(th) <= budget_bytes:
            best = th                     # keep the largest fitting divisor
    if best is None:
        legal = [th for th in range(1, H + 1)
                 if H % th == 0 and (th == H or (th * W) % 8 == 0)]
        best = min(legal)
    return best, est(best)


# ---------------------------------------------------------------------------
# Wrapper
# ---------------------------------------------------------------------------
def deform_conv3d_forward(x_nchw, w_off, b_off, w_def, groups, *,
                          compute_dtype=jnp.bfloat16, select_dtype=None,
                          vmem_budget_bytes=None):
    """Forward pass of DeformConv3d (offset conv + deformable grouped conv).

    compute_dtype: dtype of the MXU matmul operands (s, xw); f32 accumulation.
    select_dtype:  dtype of the [TP, Qp_pad] elementwise S construction
                   (defaults to compute_dtype; pass float32 on v5e).
    """
    if select_dtype is None:
        select_dtype = compute_dtype
    N, C, H, W = x_nchw.shape
    Hp = H + 2 * PAD
    Wp = _round_up(W + 2 * PAD, 8)        # width-pad so in-kernel reshapes align
    Qp = Hp * Wp
    Qp_pad = _round_up(Qp, 128)           # matmul-K / compare / roll dimension
    # Weighted one-hot corners never wrap under the +1 / +Wp lane rolls:
    assert (H + 1) * Wp + (W + 1) < Qp_pad

    mxu_bytes = jnp.dtype(compute_dtype).itemsize
    sel_bytes = jnp.dtype(select_dtype).itemsize

    x_nhwc = jnp.transpose(x_nchw, (0, 2, 3, 1)).astype(jnp.float32)
    x_pad = jnp.pad(x_nhwc, ((0, 0), (PAD, PAD), (PAD, Wp - W - PAD), (0, 0)))
    xq = x_pad.reshape(N, Qp, C)
    if Qp_pad > Qp:
        xq = jnp.pad(xq, ((0, 0), (0, Qp_pad - Qp), (0, 0)))

    # offset-conv weights: output channels reordered to [9 x dy, 9 x dx], then
    # per-tap [9, C, 18] so the kernel does plain matmuls.
    perm = jnp.concatenate([jnp.arange(0, 2 * NTAPS, 2),
                            jnp.arange(1, 2 * NTAPS, 2)])
    w_off_r = jnp.transpose(w_off.astype(jnp.float32)[perm],
                            (2, 3, 1, 0)).reshape(NTAPS, C, 2 * NTAPS)
    b_off_r = b_off.astype(jnp.float32)[perm].reshape(1, 2 * NTAPS)
    w_def_r = _dense_group_weight(w_def.astype(jnp.float32), C, groups)

    budget, hard_cap = _vmem_caps()
    if vmem_budget_bytes is not None:
        budget = vmem_budget_bytes
    TH, vmem_est = _choose_row_tile(H, W, C, Wp, Qp_pad, budget,
                                    sel_bytes, mxu_bytes)
    if vmem_est > hard_cap:
        # TODO(synk): banded-K / manual-DMA gather for large feature maps.
        raise ValueError(
            f"DeformConv3d Pallas kernel: smallest row tile needs "
            f"~{vmem_est // 2**20} MiB VMEM (> {hard_cap // 2**20} MiB cap); "
            "feature map too large for the dense one-hot gather.")
    n_row_tiles = H // TH
    vmem_limit = int(min(hard_cap, max(32 * 1024 * 1024, int(1.3 * vmem_est))))

    flops = N * (2 * H * W * NTAPS * C * 2 * NTAPS               # offset conv
                 + NTAPS * 2 * Qp_pad * C * C                    # xw (per batch)
                 + NTAPS * 2 * H * W * Qp_pad * C                # S @ xw
                 + NTAPS * 8 * H * W * Qp_pad)                   # S construction
    bytes_accessed = 4 * (xq.size + N * H * W * C
                          + w_off_r.size + b_off_r.size + w_def_r.size)

    kernel = functools.partial(
        _deform_kernel, H=H, W=W, C=C, TH=TH, Wp=Wp, Qp_pad=Qp_pad,
        roll_sign=_roll_sign(), mxu_dtype=compute_dtype,
        select_dtype=select_dtype)

    out_flat = pl.pallas_call(
        kernel,
        out_shape=jax.ShapeDtypeStruct((N, H * W, C), jnp.float32),
        grid=(N, n_row_tiles),
        in_specs=[
            pl.BlockSpec((1, Qp_pad, C), lambda b, t: (b, 0, 0)),  # flat frame
            # TODO(synk): single-buffer these constant weights
            # (pipeline_mode=pl.Buffered(1)) once that path is battle-tested.
            pl.BlockSpec((NTAPS, C, 2 * NTAPS), lambda b, t: (0, 0, 0)),
            pl.BlockSpec((1, 2 * NTAPS), lambda b, t: (0, 0)),
            pl.BlockSpec((NTAPS, C, C), lambda b, t: (0, 0, 0)),
        ],
        out_specs=pl.BlockSpec((1, TH * W, C), lambda b, t: (b, t, 0)),
        scratch_shapes=[pltpu.VMEM((NTAPS, Qp_pad, C), compute_dtype)],
        compiler_params=pltpu.CompilerParams(
            # row-tile axis is "arbitrary": the xw scratch is filled at t == 0
            # and reused by every later row tile of the same batch element.
            dimension_semantics=("parallel", "arbitrary"),
            vmem_limit_bytes=vmem_limit),
        cost_estimate=pl.CostEstimate(flops=int(flops), transcendentals=0,
                                      bytes_accessed=int(bytes_accessed)),
    )(xq, w_off_r, b_off_r, w_def_r)

    out_nhwc = out_flat.reshape(N, H, W, C)
    return jnp.transpose(out_nhwc, (0, 3, 1, 2))                  # back to NCHW


# ---------------------------------------------------------------------------
# Pure-JAX reference (torchvision deform_conv2d semantics)
# ---------------------------------------------------------------------------
def reference_forward(x_nchw, w_off, b_off, w_def, groups):
    N, C, H, W = x_nchw.shape
    x = x_nchw.astype(jnp.float32)
    offsets = jax.lax.conv_general_dilated(
        x, w_off.astype(jnp.float32), window_strides=(1, 1),
        padding=((1, 1), (1, 1)),
        dimension_numbers=("NCHW", "OIHW", "NCHW")) + b_off.reshape(1, -1, 1, 1)

    x_nhwc = jnp.transpose(x, (0, 2, 3, 1))
    xpad = jnp.pad(x_nhwc, ((0, 0), (PAD, PAD), (PAD, PAD), (0, 0)))
    Hp, Wp = H + 2 * PAD, W + 2 * PAD
    w_dense = _dense_group_weight_loop(w_def.astype(jnp.float32), C, groups)

    hh = jnp.arange(H, dtype=jnp.float32).reshape(1, H, 1)
    ww = jnp.arange(W, dtype=jnp.float32).reshape(1, 1, W)
    b_idx = jnp.arange(N).reshape(N, 1, 1)

    out = jnp.zeros((N, H, W, C), jnp.float32)
    for k in range(NTAPS):
        i, j = k // KW, k % KW
        off_y = offsets[:, 2 * k]
        off_x = offsets[:, 2 * k + 1]
        y = hh + (i - PAD) + off_y
        xq = ww + (j - PAD) + off_x
        valid = ((y > -1.0) & (y < H) & (xq > -1.0) & (xq < W)).astype(jnp.float32)
        y0 = jnp.floor(y)
        x0 = jnp.floor(xq)
        ly = y - y0
        lx = xq - x0
        y0i = jnp.clip(y0.astype(jnp.int32) + PAD, 0, Hp - 1)
        x0i = jnp.clip(x0.astype(jnp.int32) + PAD, 0, Wp - 1)
        y1i = jnp.clip(y0.astype(jnp.int32) + 1 + PAD, 0, Hp - 1)
        x1i = jnp.clip(x0.astype(jnp.int32) + 1 + PAD, 0, Wp - 1)
        v00 = xpad[b_idx, y0i, x0i]
        v01 = xpad[b_idx, y0i, x1i]
        v10 = xpad[b_idx, y1i, x0i]
        v11 = xpad[b_idx, y1i, x1i]
        samp = (((1 - ly) * (1 - lx))[..., None] * v00
                + ((1 - ly) * lx)[..., None] * v01
                + (ly * (1 - lx))[..., None] * v10
                + (ly * lx)[..., None] * v11) * valid[..., None]
        out = out + jnp.einsum("nhwc,cd->nhwd", samp, w_dense[k])
    return jnp.transpose(out, (0, 3, 1, 2))


if __name__ == "__main__":
    key = jax.random.PRNGKey(0)
    N, C, H, W = 2, 4, 16, 16
    groups = 2

    k1, k2, k3, k4 = jax.random.split(key, 4)
    x = jax.random.normal(k1, (N, C, H, W), jnp.float32)
    # Deterministic synthetic parameters (module __init__ shapes):
    w_off = jax.random.normal(k2, (2 * KH * KW, C, KH, KW), jnp.float32) * 0.1
    b_off = jax.random.normal(k3, (2 * KH * KW,), jnp.float32) * 0.1
    w_def = jax.random.normal(k4, (C, C // groups, KH, KW), jnp.float32) * 0.3

    ref = reference_forward(x, w_off, b_off, w_def, groups)

    # f32 operand path: tight correctness check.
    out32 = deform_conv3d_forward(x, w_off, b_off, w_def, groups,
                                  compute_dtype=jnp.float32)
    out32 = jax.block_until_ready(out32)
    assert out32.shape == (N, C, H, W)
    err32 = float(jnp.max(jnp.abs(out32 - ref)))
    if err32 > 5e-2:
        raise AssertionError(f"f32 Pallas/reference mismatch, max abs err = {err32}")

    # Default (bf16 S construction + bf16 matmul operands, f32 accumulation).
    outbf = deform_conv3d_forward(x, w_off, b_off, w_def, groups)
    outbf = jax.block_until_ready(outbf)
    errbf = float(jnp.max(jnp.abs(outbf - ref)))
    if errbf > 3e-1:
        raise AssertionError(f"bf16 Pallas/reference mismatch, max abs err = {errbf}")

    print("KERNEL_OK")
</pallas_src>

<mosaic_0001>
module attributes {stable_mosaic.version = 11 : i64} {
  func.func @_probe(%arg0: memref<8x128xf32, #tpu.memory_space<vmem>>, %arg1: memref<8x128xf32, #tpu.memory_space<vmem>>) attributes {dimension_semantics = [], scalar_prefetch = 0 : i64, scratch_operands = 0 : i64, tpu.core_type = #tpu.core_type<tc>} {
    %c0 = arith.constant 0 : index
    %c0_0 = arith.constant 0 : index
    %0 = vector.load %arg0[%c0, %c0_0] : memref<8x128xf32, #tpu.memory_space<vmem>>, vector<8x128xf32>
    %c1_i32 = arith.constant 1 : i32
    %1 = tpu.dynamic_rotate %0 by %c1_i32 dim 1 : vector<8x128xf32>, i32 -> vector<8x128xf32>
    %c0_1 = arith.constant 0 : index
    %c0_2 = arith.constant 0 : index
    %2 = vector.load %arg1[%c0_1, %c0_2] : memref<8x128xf32, #tpu.memory_space<vmem>>, vector<8x128xf32>
    tpu.vector_store %arg1[%c0_1, %c0_2], %1 {strides = array<i32>} : memref<8x128xf32, #tpu.memory_space<vmem>>, vector<8x128xf32>,
    return
  }
}

</mosaic_0001>

<llo_original>
// kernel: tpu_custom_call.1
$region0: #{tpu_custom_call.1}
  #allocation0 [shape = 'u32[]', space=smem, size = 0x4, offset = 0x4, fixed_abs, tag = 'smem constant byte address 0x4 - core index']
  #allocation1 [shape = 'u32[72,128]{1,0:T(1,128)}', space=vmem, size = 0x9000, scoped, tag = 'internal scratch']
  %s0 = inlined_call_operand.hbm [shape: f32[8,128], index: 0, kind: input, shape index: {}]
  %s1 = inlined_call_operand.hbm [shape: f32[8,128], index: 1, kind: output, shape index: {}]
  %s2 = sld [smem:[#allocation0]]
  $region18: #{tpu_custom_call.1} parent=0
    _
  %s4 = ssub.s32 1, %s2
  %s5 = scalar_select 0, %s4, %s2
  $region1: #{tpu_custom_call.1} parent=0
    #allocation2 [shape = 'u8[4096]{0}', space=vmem, size = 0x1000, scoped, tag = 'input window, operand 0, single buffered']
    #allocation3 [shape = 's32[1]{0}', space=sflag, size = 0x4, scoped, tag = 'scoped memory for tpu_custom_call.1']
    #allocation4 [shape = 's32[1]{0}', space=sflag, size = 0x4, scoped, tag = 'scoped memory for tpu_custom_call.1']
    #allocation5 [shape = 'u8[4096]{0}', space=vmem, size = 0x1000, scoped, tag = 'output window, operand 0, single buffered']
    %6 = vsyncpa [#allocation3], 0
    %7 = vsyncpa [#allocation4], 0
    // Predicated region
    $region2: #{tpu_custom_call.1} parent=1 // pred_check
      _
    $region3: #{tpu_custom_call.1} parent=1 // pred_check_branch
      %9 = sbr.rel (0) target = $region5
    $region4: #{tpu_custom_call.1} parent=1 // pred_region
      %11 = vsyncadd [#allocation3], 0
      %s13 = sshll.u32 %s0, 4
      %s14 = int_to_ptr.hbm [resolvable:$true] %s13
      %s15 = sshll.u32 [#allocation2], 4
      %s16 = int_to_ptr.vmem [resolvable:$true] %s15
      %18 = dma.hbm_to_vmem [thread:$0]  %s14, 128, %s16, [#allocation3]
    $region5: #{tpu_custom_call.1} parent=1 // pred_fallthru
      _
    // Predicated region
    $region6: #{tpu_custom_call.1} parent=1 // pred_check
      _
    $region7: #{tpu_custom_call.1} parent=1 // pred_check_branch
      %20 = sbr.rel (0) target = $region9
    $region8: #{tpu_custom_call.1} parent=1 // pred_region
      %22 = dma.done [#allocation3], 128
    $region9: #{tpu_custom_call.1} parent=1 // pred_fallthru
      _
    %v23 = vld [vmem:[#allocation2] sm:$0xff]
    %24 = vrot.lane.b32.xlu0 %v23, 1
    %v25 = vpop.permute.xlu0 %24
    %26 = vst [vmem:[#allocation5] sm:$0xff] %v25
    // Predicated region
    $region10: #{tpu_custom_call.1} parent=1 // pred_check
      _
    $region11: #{tpu_custom_call.1} parent=1 // pred_check_branch
      %28 = sbr.rel (0) target = $region13
    $region12: #{tpu_custom_call.1} parent=1 // pred_region
      %30 = vsyncadd [#allocation4], 0
      %s32 = sshll.u32 [#allocation5], 4
      %s33 = int_to_ptr.vmem [resolvable:$true] %s32
      %s34 = sshll.u32 %s1, 4
      %s35 = int_to_ptr.hbm [resolvable:$true] %s34
      %37 = dma.vmem_to_hbm [thread:$0]  %s33, 128, %s35, [#allocation4]
    $region13: #{tpu_custom_call.1} parent=1 // pred_fallthru
      _
    // Predicated region
    $region14: #{tpu_custom_call.1} parent=1 // pred_check
      _
    $region15: #{tpu_custom_call.1} parent=1 // pred_check_branch
      %39 = sbr.rel (0) target = $region17
    $region16: #{tpu_custom_call.1} parent=1 // pred_region
      %41 = dma.done [#allocation4], 128
    $region17: #{tpu_custom_call.1} parent=1 // pred_fallthru
      _
    %42 = vsyncpa [#allocation3], 1
    %43 = vsyncpa [#allocation4], 1

</llo_original>
